<compile_context>
chip_gen: v6e
topology: v6e:2x2x1
jax: 0.10.0
libtpu: 0.0.40
codegen_flags: <defaults>
</compile_context>

<pallas_src>
import jax
import jax.numpy as jnp
from jax.experimental import pallas as pl
from jax.experimental.pallas import tpu as pltpu


def _awl_kernel(x_ref, out_ref):
    """x_ref: (2, num) f32 in VMEM (row 0 = params, row 1 = losses).
    out_ref: (1,) f32 in SMEM."""
    p = x_ref[0:1, :]  # (1, num) params
    l = x_ref[1:2, :]  # (1, num) losses
    # 0.5 / p^2 * loss + log(1 + p)   (exact reciprocal: keeps rtol=1e-5)
    term = 0.5 * pl.reciprocal(p * p, approx=False) * l + jnp.log(1.0 + p)
    out_ref[0] = jnp.sum(term)


def automatic_weighted_loss(params: jax.Array, losses: jax.Array) -> jax.Array:
    """params: (num,) f32, losses: (num,) f32 -> scalar f32."""
    # Single packing op (one concatenate), no scatter/pad round-trips.
    x = jnp.stack(
        [params.astype(jnp.float32), losses.astype(jnp.float32)], axis=0
    )  # (2, num)

    out = pl.pallas_call(
        _awl_kernel,
        out_shape=jax.ShapeDtypeStruct((1,), jnp.float32),
        in_specs=[pl.BlockSpec(memory_space=pltpu.MemorySpace.VMEM)],
        out_specs=pl.BlockSpec(memory_space=pltpu.MemorySpace.SMEM),
    )(x)
    return out[0]


# jit so the stack + pallas_call + scalar extraction compile into one executable.
automatic_weighted_loss = jax.jit(automatic_weighted_loss)


if __name__ == "__main__":
    num = 3
    # Deterministic parameter init: PyTorch module uses torch.ones(num).
    params = jnp.ones((num,), jnp.float32)

    # Deterministic example "losses" (positive scalars), as the forward expects.
    key = jax.random.PRNGKey(0)
    losses = jax.random.uniform(key, (num,), jnp.float32, minval=0.1, maxval=2.0)

    result = jax.block_until_ready(automatic_weighted_loss(params, losses))

    # Reference check in plain JAX (same math as the PyTorch forward).
    ref = jnp.sum(0.5 / params**2 * losses + jnp.log(1.0 + params))
    assert jnp.allclose(result, ref, rtol=1e-5, atol=1e-5), (result, ref)

    print("KERNEL_OK")
</pallas_src>

<mosaic_0001>
module attributes {stable_mosaic.version = 11 : i64} {
  func.func @_awl_kernel(%arg0: memref<2x3xf32, #tpu.memory_space<vmem>>, %arg1: memref<1xf32, #tpu.memory_space<smem>>) attributes {dimension_semantics = [], scalar_prefetch = 0 : i64, scratch_operands = 0 : i64, tpu.core_type = #tpu.core_type<tc>} {
    %c0 = arith.constant 0 : index
    %c0_0 = arith.constant 0 : index
    %0 = vector.load %arg0[%c0, %c0_0] : memref<2x3xf32, #tpu.memory_space<vmem>>, vector<1x3xf32>
    %c1 = arith.constant 1 : index
    %c0_1 = arith.constant 0 : index
    %1 = vector.load %arg0[%c1, %c0_1] : memref<2x3xf32, #tpu.memory_space<vmem>>, vector<1x3xf32>
    %2 = arith.mulf %0, %0 : vector<1x3xf32>
    %3 = tpu.reciprocal %2 : vector<1x3xf32> -> vector<1x3xf32>
    %cst = arith.constant 5.000000e-01 : f32
    %4 = vector.broadcast %cst : f32 to vector<1x3xf32>
    %5 = arith.mulf %4, %3 : vector<1x3xf32>
    %6 = arith.mulf %5, %1 : vector<1x3xf32>
    %cst_2 = arith.constant 1.000000e+00 : f32
    %7 = vector.broadcast %cst_2 : f32 to vector<1x3xf32>
    %8 = arith.addf %7, %0 : vector<1x3xf32>
    %9 = math.log %8 : vector<1x3xf32>
    %10 = arith.addf %6, %9 : vector<1x3xf32>
    %11 = vector.shape_cast %10 : vector<1x3xf32> to vector<1x1x3xf32>
    %cst_3 = arith.constant dense<0.000000e+00> : vector<1xf32>
    %12 = vector.multi_reduction <add>, %11, %cst_3 [1, 2] : vector<1x1x3xf32> to vector<1xf32>
    %13 = vector.shape_cast %12 : vector<1xf32> to vector<1x1x1xf32>
    %14 = vector.extract %13[0, 0, 0] : f32 from vector<1x1x1xf32>
    %c0_4 = arith.constant 0 : index
    %15 = memref.load %arg1[%c0_4] : memref<1xf32, #tpu.memory_space<smem>>
    memref.store %14, %arg1[%c0_4] : memref<1xf32, #tpu.memory_space<smem>>
    return
  }
}

</mosaic_0001>

<llo_original>
// kernel: automatic_weighted_loss.1
$region0: #{automatic_weighted_loss.1}
  #allocation0 [shape = 'u32[]', space=smem, size = 0x4, offset = 0x4, fixed_abs, tag = 'smem constant byte address 0x4 - core index']
  #allocation1 [shape = 'u32[144,128]{1,0:T(1,128)}', space=vmem, size = 0x12000, scoped, tag = 'internal scratch']
  %s0 = inlined_call_operand.vmem [shape: f32[2,3], index: 0, kind: input, shape index: {}]
  %s1 = inlined_call_operand.hbm [shape: f32[1], index: 1, kind: output, shape index: {}]
  %s2 = sld [smem:[#allocation0]]
  $region14: #{automatic_weighted_loss.1} parent=0
    _
  %s4 = ssub.s32 1, %s2
  %s5 = scalar_select 0, %s4, %s2
  $region1: #{automatic_weighted_loss.1} parent=0
    #allocation2 [shape = 'u8[512]{0}', space=smem, size = 0x200, scoped, tag = 'output window, operand 0, single buffered']
    #allocation3 [shape = 's32[1]{0}', space=sflag, size = 0x4, scoped, tag = 'scoped memory for automatic_weighted_loss.1']
    %6 = vsyncpa [#allocation3], 0
    // Predicated region
    $region2: #{automatic_weighted_loss.1} parent=1 // pred_check
      _
    $region3: #{automatic_weighted_loss.1} parent=1 // pred_check_branch
      %8 = sbr.rel (0) target = $region5
    $region4: #{automatic_weighted_loss.1} parent=1 // pred_region
      _
    $region5: #{automatic_weighted_loss.1} parent=1 // pred_fallthru
      _
    %v9 = vld [vmem:[%s0] sm:$0x1]
    %v10 = vld [vmem:[%s0 + $0x1] sm:$0x1]
    %v11 = vmul.f32 %v9, %v9
    %v12 = vrcp.pop %v11
    %v13 = vmul.f32 %v12, 0.5
    %v14 = vmul.f32 %v13, %v10
    %v15 = vadd.f32 %v9, 1.0
    %v16 = vlog2.pop %v15
    %v17 = vmul.f32 %v16, 0.6931472
    %v18 = vadd.f32 %v14, %v17
    %vm19 = vcmask 16384
    %v20 = vsel %vm19, %v18, 0.0
    %21 = vadd.xlane.f32.xlu0 %v20
    %v22 = vpop.xlane.xlu0 %21
    %v23 = vrot.slane %v22, 4
    %v24 = vadd.f32 %v22, %v23
    %v25 = vrot.slane %v24, 2
    %v26 = vadd.f32 %v24, %v25
    %v27 = vrot.slane %v26, 1
    %v28 = vadd.f32 %v26, %v27
    %s29 = vtos %v28
    %s30 = scalar_lea.smem [#allocation2], 0
    %31 = sst [smem:[%s30]] %s29
    // Predicated region
    $region6: #{automatic_weighted_loss.1} parent=1 // pred_check
      _
    $region7: #{automatic_weighted_loss.1} parent=1 // pred_check_branch
      %33 = sbr.rel (0) target = $region9
    $region8: #{automatic_weighted_loss.1} parent=1 // pred_region
      %s35 = ssub.s32 16, 16
      %36 = vsyncadd [#allocation3], %s35
      %39 = dma.smem_to_hbm [#allocation2], 16, %s1, [#allocation3]
    $region9: #{automatic_weighted_loss.1} parent=1 // pred_fallthru
      _
    // Predicated region
    $region10: #{automatic_weighted_loss.1} parent=1 // pred_check
      _
    $region11: #{automatic_weighted_loss.1} parent=1 // pred_check_branch
      %41 = sbr.rel (0) target = $region13
    $region12: #{automatic_weighted_loss.1} parent=1 // pred_region
      %42 = dma.done [#allocation3], 16
    $region13: #{automatic_weighted_loss.1} parent=1 // pred_fallthru
      _
    %43 = sfence
    %44 = vsyncpa [#allocation3], 1

</llo_original>
